<compile_context>
chip_gen: v7x
topology: tpu7x:2x2x1
jax: 0.10.0
libtpu: 0.0.40
codegen_flags: <defaults>
</compile_context>

<pallas_src>
import jax
import jax.numpy as jnp
from jax.experimental import pallas as pl
from jax.experimental.pallas import tpu as pltpu

D_BERT = 768            # BERT hidden size (lane aligned: 6 * 128)
H_LSTM = 200            # lstm_hidden_size (PyTorch value)
G = 4 * H_LSTM          # PyTorch gate width (i, f, g, o) = 800
H_PAD = 256             # lane-aligned padded hidden size (2 * 128)
G_PAD = 4 * H_PAD       # padded gate width = 1024
N_CLS = 3               # fc output features
N_PAD = 128             # lane-dense padded fc output width


def _round_up(x, m):
    return (x + m - 1) // m * m


# ------------------------- kernel 1: streamed pooling ------------------------

def _pool_kernel(hidden_ref, mask_ref, pooled_ref, acc_ref, cnt_ref):
    s = pl.program_id(1)

    @pl.when(s == 0)
    def _():
        acc_ref[...] = jnp.zeros_like(acc_ref)
        cnt_ref[...] = jnp.zeros_like(cnt_ref)

    m = mask_ref[...]                                        # (Bt, St)
    acc_ref[...] += jnp.sum(hidden_ref[...] * m[:, :, None], axis=1)
    cnt_ref[...] += jnp.sum(m, axis=1, keepdims=True)

    @pl.when(s == pl.num_programs(1) - 1)
    def _():
        # Clamp guards all-masked (length-0) rows; reciprocal goes to the EUP.
        denom = jnp.maximum(cnt_ref[...], 1.0)
        pooled_ref[...] = acc_ref[...] * pl.reciprocal(denom, approx=True)


def masked_mean_pool(hidden, mask, *, bt=8, st_max=256):
    """Streamed masked mean over the sequence: (B,S,768),(B,S) -> (Bp,768).

    st_max=256 keeps a hidden block at ~6 MiB (v7x-safe); on v5e/v6e a 512 tile
    is also fine if more bandwidth is needed.
    """
    B, S, _ = hidden.shape
    Bp = _round_up(B, bt)
    st = min(st_max, _round_up(S, 8))
    Sp = _round_up(S, st)
    if (Bp, Sp) != (B, S):
        hidden = jnp.pad(hidden, ((0, Bp - B), (0, Sp - S), (0, 0)))
        mask = jnp.pad(mask, ((0, Bp - B), (0, Sp - S)))

    grid = (Bp // bt, Sp // st)
    return pl.pallas_call(
        _pool_kernel,
        out_shape=jax.ShapeDtypeStruct((Bp, D_BERT), jnp.float32),
        grid_spec=pltpu.PrefetchScalarGridSpec(
            num_scalar_prefetch=0,
            grid=grid,
            in_specs=[
                pl.BlockSpec((bt, st, D_BERT), lambda b, s: (b, s, 0)),
                pl.BlockSpec((bt, st), lambda b, s: (b, s)),
            ],
            out_specs=pl.BlockSpec((bt, D_BERT), lambda b, s: (b, 0)),
            scratch_shapes=[
                pltpu.VMEM((bt, D_BERT), jnp.float32),   # masked-sum accumulator
                pltpu.VMEM((bt, 1), jnp.float32),        # mask-count accumulator
            ],
        ),
        compiler_params=pltpu.CompilerParams(
            dimension_semantics=("parallel", "arbitrary"),
            vmem_limit_bytes=32 * 1024 * 1024,
        ),
    )(hidden, mask)


# ------------------------- kernel 2: LSTM cells + FC -------------------------

def _lstm_cell(x, h, c, wih_t, whh_t, b):
    """PyTorch-convention LSTM cell (gate order i, f, g, o), H padded to 256."""
    gates = (jnp.dot(x, wih_t, preferred_element_type=jnp.float32)
             + jnp.dot(h, whh_t, preferred_element_type=jnp.float32)
             + b)
    i = jax.nn.sigmoid(gates[:, 0 * H_PAD:1 * H_PAD])
    f = jax.nn.sigmoid(gates[:, 1 * H_PAD:2 * H_PAD])
    g = jnp.tanh(gates[:, 2 * H_PAD:3 * H_PAD])
    o = jax.nn.sigmoid(gates[:, 3 * H_PAD:4 * H_PAD])
    c_new = f * c + i * g
    h_new = o * jnp.tanh(c_new)
    return h_new, c_new


def _lstm_fc_kernel(pooled_ref,
                    wih1f_ref, whh1f_ref, b1f_ref,
                    wih1r_ref, whh1r_ref, b1r_ref,
                    wih2f_ref, whh2f_ref, b2f_ref,
                    wih2r_ref, whh2r_ref, b2r_ref,
                    wfc1_ref, wfc2_ref, wfc3_ref, wfc4_ref, bfc_ref,
                    out_ref):
    pooled = pooled_ref[...]                                  # (Bp, 768)
    zeros = jnp.zeros((pooled.shape[0], H_PAD), jnp.float32)

    # rnn1: bidirectional LSTM over a length-1 sequence (the pooled vector).
    h1_f, _ = _lstm_cell(pooled, zeros, zeros,
                         wih1f_ref[...], whh1f_ref[...], b1f_ref[...])
    h1_r, _ = _lstm_cell(pooled, zeros, zeros,
                         wih1r_ref[...], whh1r_ref[...], b1r_ref[...])

    # rnn2: bidirectional LSTM over the length-2 sequence [h1_f, h1_r]
    # (PyTorch feeds h1 of shape (2, B, 200) straight in as a sequence).
    h, c = _lstm_cell(h1_f, zeros, zeros,
                      wih2f_ref[...], whh2f_ref[...], b2f_ref[...])
    h2_f, _ = _lstm_cell(h1_r, h, c,
                         wih2f_ref[...], whh2f_ref[...], b2f_ref[...])

    h, c = _lstm_cell(h1_r, zeros, zeros,
                      wih2r_ref[...], whh2r_ref[...], b2r_ref[...])
    h2_r, _ = _lstm_cell(h1_f, h, c,
                         wih2r_ref[...], whh2r_ref[...], b2r_ref[...])

    # fc on feat = [h1_f, h2_f, h1_r, h2_r]: four accumulated lane-aligned
    # matmuls instead of a non-128-aligned 800-wide concatenate.
    out_ref[...] = (
        jnp.dot(h1_f, wfc1_ref[...], preferred_element_type=jnp.float32)
        + jnp.dot(h2_f, wfc2_ref[...], preferred_element_type=jnp.float32)
        + jnp.dot(h1_r, wfc3_ref[...], preferred_element_type=jnp.float32)
        + jnp.dot(h2_r, wfc4_ref[...], preferred_element_type=jnp.float32)
        + bfc_ref[...])


def _lstm_fc(pooled, kp):
    Bp = pooled.shape[0]
    args = (pooled,
            kp["wih1f"], kp["whh1f"], kp["b1f"],
            kp["wih1r"], kp["whh1r"], kp["b1r"],
            kp["wih2f"], kp["whh2f"], kp["b2f"],
            kp["wih2r"], kp["whh2r"], kp["b2r"],
            kp["wfc1"], kp["wfc2"], kp["wfc3"], kp["wfc4"], kp["bfc"])
    vmem = pl.BlockSpec(memory_space=pltpu.MemorySpace.VMEM)
    return pl.pallas_call(
        _lstm_fc_kernel,
        out_shape=jax.ShapeDtypeStruct((Bp, N_PAD), jnp.float32),
        in_specs=[vmem] * len(args),
        out_specs=vmem,
        compiler_params=pltpu.CompilerParams(vmem_limit_bytes=32 * 1024 * 1024),
    )(*args)


# ----------------------- parameter padding & top-level -----------------------

def _pad_axis(x, axis, size):
    pad = [(0, 0)] * x.ndim
    pad[axis] = (0, size - x.shape[axis])
    return jnp.pad(x, pad)


def _pad_gate_cols(w_t):
    """(..., 4*H_LSTM) -> (..., 4*H_PAD): pad each of the 4 gate blocks to 256."""
    chunks = jnp.split(w_t, 4, axis=-1)
    return jnp.concatenate([_pad_axis(c, -1, H_PAD) for c in chunks], axis=-1)


def pad_params_for_kernel(p):
    """Zero-pad PyTorch-shaped (pre-transposed) params to lane-aligned shapes.

    Exact: padded gate lanes yield c=0, h=0.5*tanh(0)=0, and padded whh / fc
    rows are zero, so padded lanes never leak into the real 200 lanes.
    """
    kp = {
        # rnn1 (input 768), forward / reverse
        "wih1f": _pad_gate_cols(p["wih1f_t"]),                         # (768, 1024)
        "whh1f": _pad_axis(_pad_gate_cols(p["whh1f_t"]), 0, H_PAD),    # (256, 1024)
        "b1f":   _pad_gate_cols(p["b1f"]),                             # (1, 1024)
        "wih1r": _pad_gate_cols(p["wih1r_t"]),
        "whh1r": _pad_axis(_pad_gate_cols(p["whh1r_t"]), 0, H_PAD),
        "b1r":   _pad_gate_cols(p["b1r"]),
        # rnn2 (input 200), forward / reverse
        "wih2f": _pad_axis(_pad_gate_cols(p["wih2f_t"]), 0, H_PAD),
        "whh2f": _pad_axis(_pad_gate_cols(p["whh2f_t"]), 0, H_PAD),
        "b2f":   _pad_gate_cols(p["b2f"]),
        "wih2r": _pad_axis(_pad_gate_cols(p["wih2r_t"]), 0, H_PAD),
        "whh2r": _pad_axis(_pad_gate_cols(p["whh2r_t"]), 0, H_PAD),
        "b2r":   _pad_gate_cols(p["b2r"]),
        # fc bias (1, 3) -> (1, 128)
        "bfc":   _pad_axis(p["bfc"], -1, N_PAD),
    }
    # fc W^T (800, 3): split into chunks matching [h1_f, h2_f, h1_r, h2_r],
    # each padded (200,3) -> (256,128).
    for idx, chunk in enumerate(jnp.split(p["wfc_t"], 4, axis=0)):
        kp[f"wfc{idx + 1}"] = _pad_axis(_pad_axis(chunk, 0, H_PAD), -1, N_PAD)
    return kp


def lstm_head(hidden, mask, params):
    """masked mean pool -> bi-LSTM(768->200) -> bi-LSTM(200->200) -> FC(800,3)."""
    B = hidden.shape[0]
    kp = pad_params_for_kernel(params)
    pooled = masked_mean_pool(hidden, mask)        # (Bp, 768), streamed over S
    out_pad = _lstm_fc(pooled, kp)                 # (Bp, 128), lane-dense
    return out_pad[:B, :N_CLS]


# ----------------------------- parameter setup -------------------------------

def init_params(key):
    """Deterministic init matching the PyTorch module's parameter shapes.

    PyTorch LSTM stores W_ih (4H, in), W_hh (4H, H), b_ih (4H,), b_hh (4H,)
    per direction; we pass the transposes and the combined bias (b_ih + b_hh).
    """
    ks = jax.random.split(key, 20)
    bound = 1.0 / (H_LSTM ** 0.5)

    def u(k, shape, b=bound):
        return jax.random.uniform(k, shape, jnp.float32, -b, b)

    params = {
        # rnn1 (input 768), forward / reverse
        "wih1f_t": u(ks[0], (D_BERT, G)),
        "whh1f_t": u(ks[1], (H_LSTM, G)),
        "b1f":     u(ks[2], (1, G)) + u(ks[3], (1, G)),
        "wih1r_t": u(ks[4], (D_BERT, G)),
        "whh1r_t": u(ks[5], (H_LSTM, G)),
        "b1r":     u(ks[6], (1, G)) + u(ks[7], (1, G)),
        # rnn2 (input 200), forward / reverse
        "wih2f_t": u(ks[8], (H_LSTM, G)),
        "whh2f_t": u(ks[9], (H_LSTM, G)),
        "b2f":     u(ks[10], (1, G)) + u(ks[11], (1, G)),
        "wih2r_t": u(ks[12], (H_LSTM, G)),
        "whh2r_t": u(ks[13], (H_LSTM, G)),
        "b2r":     u(ks[14], (1, G)) + u(ks[15], (1, G)),
        # fc: Linear(800, 3)
        "wfc_t":   u(ks[16], (G, N_CLS), 1.0 / (G ** 0.5)),
        "bfc":     u(ks[17], (1, N_CLS), 1.0 / (G ** 0.5)),
    }
    return params


# ----------------------------- pure-JAX reference ----------------------------

def _cell_ref(x, h, c, wih_t, whh_t, b):
    gates = x @ wih_t + h @ whh_t + b
    i = jax.nn.sigmoid(gates[:, 0 * H_LSTM:1 * H_LSTM])
    f = jax.nn.sigmoid(gates[:, 1 * H_LSTM:2 * H_LSTM])
    g = jnp.tanh(gates[:, 2 * H_LSTM:3 * H_LSTM])
    o = jax.nn.sigmoid(gates[:, 3 * H_LSTM:4 * H_LSTM])
    c = f * c + i * g
    return o * jnp.tanh(c), c


def lstm_head_ref(hidden, mask, p):
    pooled = jnp.sum(hidden * mask[:, :, None], axis=1) / jnp.sum(
        mask, axis=1, keepdims=True)
    B = pooled.shape[0]
    z = jnp.zeros((B, H_LSTM), jnp.float32)
    h1_f, _ = _cell_ref(pooled, z, z, p["wih1f_t"], p["whh1f_t"], p["b1f"])
    h1_r, _ = _cell_ref(pooled, z, z, p["wih1r_t"], p["whh1r_t"], p["b1r"])
    h, c = _cell_ref(h1_f, z, z, p["wih2f_t"], p["whh2f_t"], p["b2f"])
    h2_f, _ = _cell_ref(h1_r, h, c, p["wih2f_t"], p["whh2f_t"], p["b2f"])
    h, c = _cell_ref(h1_r, z, z, p["wih2r_t"], p["whh2r_t"], p["b2r"])
    h2_r, _ = _cell_ref(h1_f, h, c, p["wih2r_t"], p["whh2r_t"], p["b2r"])
    feat = jnp.concatenate([h1_f, h2_f, h1_r, h2_r], axis=1)
    return feat @ p["wfc_t"] + p["bfc"]


# ----------------------------------- main ------------------------------------

if __name__ == "__main__":
    key = jax.random.PRNGKey(0)
    k_h, k_p = jax.random.split(key)

    B, S = 2, 8
    # Stand-in for bert_output[0] (last hidden states): (B, S, 768) float32.
    hidden = jax.random.normal(k_h, (B, S, D_BERT), jnp.float32)
    # Attention mask with ragged valid lengths [8, 5].
    lengths = jnp.array([8, 5], jnp.int32)
    mask = (jnp.arange(S)[None, :] < lengths[:, None]).astype(jnp.float32)

    params = init_params(k_p)

    out = lstm_head(hidden, mask, params)
    out = jax.block_until_ready(out)

    ref = lstm_head_ref(hidden, mask, params)
    assert out.shape == (B, N_CLS)
    assert jnp.allclose(out, ref, atol=1e-3, rtol=1e-3), (out, ref)

    print("KERNEL_OK")
</pallas_src>

<mosaic_0001>
module attributes {stable_mosaic.version = 11 : i64} {
  func.func @_pool_kernel(%arg0: i32, %arg1: i32, %arg2: memref<8x8x768xf32, #tpu.memory_space<vmem>>, %arg3: memref<8x8xf32, #tpu.memory_space<vmem>>, %arg4: memref<8x768xf32, #tpu.memory_space<vmem>>, %arg5: memref<8x768xf32, #tpu.memory_space<vmem>>, %arg6: memref<8x1xf32, #tpu.memory_space<vmem>>) attributes {dimension_semantics = [#tpu.dimension_semantics<parallel>, #tpu.dimension_semantics<arbitrary>], iteration_bounds = array<i64: 1, 1>, scalar_prefetch = 0 : i64, scratch_operands = 2 : i64, tpu.core_type = #tpu.core_type<tc>, window_params = [{transform_indices = @transform_0, window_bounds = array<i64: 8, 8, 768>}, {transform_indices = @transform_1, window_bounds = array<i64: 8, 8>}, {transform_indices = @transform_2, window_bounds = array<i64: 8, 768>}]} {
    %c0_i32 = arith.constant 0 : i32
    %0 = arith.cmpi eq, %arg1, %c0_i32 : i32
    %1 = arith.extui %0 : i1 to i32
    %c0_i32_0 = arith.constant 0 : i32
    %2 = arith.cmpi ne, %1, %c0_i32_0 : i32
    scf.if %2 {
      %cst_16 = arith.constant 0.000000e+00 : f32
      %20 = vector.broadcast %cst_16 : f32 to vector<8x768xf32>
      %c0_17 = arith.constant 0 : index
      %c0_18 = arith.constant 0 : index
      %21 = vector.load %arg5[%c0_17, %c0_18] : memref<8x768xf32, #tpu.memory_space<vmem>>, vector<8x768xf32>
      tpu.vector_store %arg5[%c0_17, %c0_18], %20 {strides = array<i32>} : memref<8x768xf32, #tpu.memory_space<vmem>>, vector<8x768xf32>,
      %cst_19 = arith.constant 0.000000e+00 : f32
      %22 = vector.broadcast %cst_19 : f32 to vector<8x1xf32>
      %c0_20 = arith.constant 0 : index
      %c0_21 = arith.constant 0 : index
      %23 = vector.load %arg6[%c0_20, %c0_21] : memref<8x1xf32, #tpu.memory_space<vmem>>, vector<8x1xf32>
      tpu.vector_store %arg6[%c0_20, %c0_21], %22 {strides = array<i32>} : memref<8x1xf32, #tpu.memory_space<vmem>>, vector<8x1xf32>,
    } else {
    }
    %c0 = arith.constant 0 : index
    %c0_1 = arith.constant 0 : index
    %3 = vector.load %arg3[%c0, %c0_1] : memref<8x8xf32, #tpu.memory_space<vmem>>, vector<8x8xf32>
    %c0_2 = arith.constant 0 : index
    %c0_3 = arith.constant 0 : index
    %4 = vector.load %arg5[%c0_2, %c0_3] : memref<8x768xf32, #tpu.memory_space<vmem>>, vector<8x768xf32>
    %c0_4 = arith.constant 0 : index
    %c0_5 = arith.constant 0 : index
    %c0_6 = arith.constant 0 : index
    %5 = vector.load %arg2[%c0_4, %c0_5, %c0_6] : memref<8x8x768xf32, #tpu.memory_space<vmem>>, vector<8x8x768xf32>
    %6 = vector.shape_cast %3 : vector<8x8xf32> to vector<8x8x1xf32>
    %7 = vector.broadcast %6 : vector<8x8x1xf32> to vector<8x8x768xf32>
    %8 = arith.mulf %5, %7 : vector<8x8x768xf32>
    %cst = arith.constant dense<0.000000e+00> : vector<8x768xf32>
    %9 = vector.multi_reduction <add>, %8, %cst [1] : vector<8x8x768xf32> to vector<8x768xf32>
    %10 = arith.addf %4, %9 : vector<8x768xf32>
    %c0_7 = arith.constant 0 : index
    %c0_8 = arith.constant 0 : index
    %11 = vector.load %arg5[%c0_7, %c0_8] : memref<8x768xf32, #tpu.memory_space<vmem>>, vector<8x768xf32>
    tpu.vector_store %arg5[%c0_7, %c0_8], %10 {strides = array<i32>} : memref<8x768xf32, #tpu.memory_space<vmem>>, vector<8x768xf32>,
    %c0_9 = arith.constant 0 : index
    %c0_10 = arith.constant 0 : index
    %12 = vector.load %arg6[%c0_9, %c0_10] : memref<8x1xf32, #tpu.memory_space<vmem>>, vector<8x1xf32>
    %cst_11 = arith.constant dense<0.000000e+00> : vector<8xf32>
    %13 = vector.multi_reduction <add>, %3, %cst_11 [1] : vector<8x8xf32> to vector<8xf32>
    %14 = vector.shape_cast %13 : vector<8xf32> to vector<8x1xf32>
    %15 = arith.addf %12, %14 : vector<8x1xf32>
    %c0_12 = arith.constant 0 : index
    %c0_13 = arith.constant 0 : index
    %16 = vector.load %arg6[%c0_12, %c0_13] : memref<8x1xf32, #tpu.memory_space<vmem>>, vector<8x1xf32>
    tpu.vector_store %arg6[%c0_12, %c0_13], %15 {strides = array<i32>} : memref<8x1xf32, #tpu.memory_space<vmem>>, vector<8x1xf32>,
    %c0_i32_14 = arith.constant 0 : i32
    %17 = arith.cmpi eq, %arg1, %c0_i32_14 : i32
    %18 = arith.extui %17 : i1 to i32
    %c0_i32_15 = arith.constant 0 : i32
    %19 = arith.cmpi ne, %18, %c0_i32_15 : i32
    scf.if %19 {
      %c0_16 = arith.constant 0 : index
      %c0_17 = arith.constant 0 : index
      %20 = vector.load %arg6[%c0_16, %c0_17] : memref<8x1xf32, #tpu.memory_space<vmem>>, vector<8x1xf32>
      %cst_18 = arith.constant 1.000000e+00 : f32
      %21 = vector.broadcast %cst_18 : f32 to vector<8x1xf32>
      %22 = arith.maximumf %20, %21 : vector<8x1xf32>
      %c0_19 = arith.constant 0 : index
      %c0_20 = arith.constant 0 : index
      %23 = vector.load %arg5[%c0_19, %c0_20] : memref<8x768xf32, #tpu.memory_space<vmem>>, vector<8x768xf32>
      %24 = tpu.reciprocal %22 {approx = true} : vector<8x1xf32> -> vector<8x1xf32>
      %25 = vector.broadcast %24 : vector<8x1xf32> to vector<8x768xf32>
      %26 = arith.mulf %23, %25 : vector<8x768xf32>
      %c0_21 = arith.constant 0 : index
      %c0_22 = arith.constant 0 : index
      %27 = vector.load %arg4[%c0_21, %c0_22] : memref<8x768xf32, #tpu.memory_space<vmem>>, vector<8x768xf32>
      tpu.vector_store %arg4[%c0_21, %c0_22], %26 {strides = array<i32>} : memref<8x768xf32, #tpu.memory_space<vmem>>, vector<8x768xf32>,
    } else {
    }
    return
  }
  func.func @transform_0(%arg0: i32, %arg1: i32) -> (i32, i32, i32) {
    %c0_i32 = arith.constant 0 : i32
    %c0_i32_0 = arith.constant 0 : i32
    return %arg0, %arg1, %c0_i32 : i32, i32, i32
  }
  func.func @transform_1(%arg0: i32, %arg1: i32) -> (i32, i32) {
    %c0_i32 = arith.constant 0 : i32
    return %arg0, %arg1 : i32, i32
  }
  func.func @transform_2(%arg0: i32, %arg1: i32) -> (i32, i32) {
    %c0_i32 = arith.constant 0 : i32
    %c0_i32_0 = arith.constant 0 : i32
    return %arg0, %c0_i32 : i32, i32
  }
}

</mosaic_0001>

<llo_original>
// kernel: tpu_custom_call.1
$region0: #{tpu_custom_call.1}
  #allocation0 [shape = 'u32[]', space=smem, size = 0x4, offset = 0x4, fixed_abs, tag = 'smem constant byte address 0x4 - core index']
  #allocation1 [shape = 'u32[144,128]{1,0:T(1,128)}', space=vmem, size = 0x12000, scoped, tag = 'internal scratch']
  #allocation2 [shape = 'f32[8,768]{1,0:T(8,128)}', space=vmem, size = 0x6000, scoped, tag = 'scratch operand']
  #allocation3 [shape = 'f32[8,1]{1,0:T(8,128)}', space=vmem, size = 0x1000, scoped, tag = 'scratch operand']
  %s0 = inlined_call_operand.hbm [shape: f32[8,8,768], index: 0, kind: input, shape index: {}]
  %s1 = inlined_call_operand.hbm [shape: f32[8,8], index: 1, kind: input, shape index: {}]
  %s2 = inlined_call_operand.hbm [shape: f32[8,768], index: 2, kind: output, shape index: {}]
  %s3 = sld [smem:[#allocation0]]
  $region34: #{tpu_custom_call.1} parent=0
    _
  %s5 = ssub.s32 1, %s3
  %s6 = scalar_select 0, %s5, %s3
  $region1: #{tpu_custom_call.1} parent=0
    #allocation4 [shape = 'u8[196608]{0}', space=vmem, size = 0x30000, scoped, tag = 'input window, operand 0, single buffered']
    #allocation5 [shape = 's32[1]{0}', space=sflag, size = 0x4, scoped, tag = 'scoped memory for tpu_custom_call.1']
    #allocation6 [shape = 's32[1]{0}', space=sflag, size = 0x4, scoped, tag = 'scoped memory for tpu_custom_call.1']
    #allocation7 [shape = 'u8[4096]{0}', space=vmem, size = 0x1000, scoped, tag = 'input window, operand 1, single buffered']
    #allocation8 [shape = 's32[1]{0}', space=sflag, size = 0x4, scoped, tag = 'scoped memory for tpu_custom_call.1']
    #allocation9 [shape = 'u8[24576]{0}', space=vmem, size = 0x6000, scoped, tag = 'output window, operand 0, single buffered']
    %7 = vsyncpa [#allocation5], 0
    %8 = vsyncpa [#allocation8], 0
    %9 = vsyncpa [#allocation6], 0
    // Predicated region
    $region2: #{tpu_custom_call.1} parent=1 // pred_check
      _
    $region3: #{tpu_custom_call.1} parent=1 // pred_check_branch
      %11 = sbr.rel (0) target = $region5
    $region4: #{tpu_custom_call.1} parent=1 // pred_region
      %s13 = ssub.s32 6144, 6144
      %14 = vsyncadd [#allocation5], %s13
      %s15 = sshll.u32 [#allocation4], 4
      %s16 = int_to_ptr.vmem [resolvable:$true] %s15
      %21 = dma.hbm_to_vmem [thread:$0]  %s0, 6144, %s16, [#allocation5], 768, 768, 48
    $region5: #{tpu_custom_call.1} parent=1 // pred_fallthru
      _
    // Predicated region
    $region6: #{tpu_custom_call.1} parent=1 // pred_check
      _
    $region7: #{tpu_custom_call.1} parent=1 // pred_check_branch
      %23 = sbr.rel (0) target = $region9
    $region8: #{tpu_custom_call.1} parent=1 // pred_region
      %s25 = ssub.s32 128, 128
      %26 = vsyncadd [#allocation8], %s25
      %s28 = sshll.u32 [#allocation7], 4
      %s29 = int_to_ptr.vmem [resolvable:$true] %s28
      %31 = dma.hbm_to_vmem [thread:$0]  %s1, 128, %s29, [#allocation8]
    $region9: #{tpu_custom_call.1} parent=1 // pred_fallthru
      _
    // Predicated region
    $region10: #{tpu_custom_call.1} parent=1 // pred_check
      _
    $region11: #{tpu_custom_call.1} parent=1 // pred_check_branch
      %33 = sbr.rel (0) target = $region13
    $region12: #{tpu_custom_call.1} parent=1 // pred_region
      %34 = dma.done [#allocation5], 6144
    $region13: #{tpu_custom_call.1} parent=1 // pred_fallthru
      _
    // Predicated region
    $region14: #{tpu_custom_call.1} parent=1 // pred_check
      _
    $region15: #{tpu_custom_call.1} parent=1 // pred_check_branch
      %36 = sbr.rel (0) target = $region17
    $region16: #{tpu_custom_call.1} parent=1 // pred_region
      %37 = dma.done [#allocation8], 128
    $region17: #{tpu_custom_call.1} parent=1 // pred_fallthru
      _
    %p38 = scmp.eq.s32.totalorder 0, 0
    // Predicated region
    $region18: #{tpu_custom_call.1} parent=1 // pred_check
      %p39 = pneg %p38
    $region19: #{tpu_custom_call.1} parent=1 // pred_check_branch
      %41 = sbr.rel (%p39) target = $region21
    $region20: #{tpu_custom_call.1} parent=1 // pred_region
      %42 = vst [vmem:[#allocation2] sm:$0xff] 0.0
      %43 = vst [vmem:[#allocation2 + $0x8] sm:$0xff] 0.0
      %44 = vst [vmem:[#allocation2 + $0x10] sm:$0xff] 0.0
      %45 = vst [vmem:[#allocation2 + $0x18] sm:$0xff] 0.0
      %46 = vst [vmem:[#allocation2 + $0x20] sm:$0xff] 0.0
      %47 = vst [vmem:[#allocation2 + $0x28] sm:$0xff] 0.0
      %vm48 = vcmask 7168
      %49 = vst.msk [vmem:[#allocation3] sm:$0xff] %vm48, 0.0
    $region21: #{tpu_custom_call.1} parent=1 // pred_fallthru
      _
    %v50 = vld [vmem:[#allocation7] sm:$0xff]
    %v51 = vld [vmem:[#allocation2] sm:$0xff]
    %v52 = vld [vmem:[#allocation2 + $0x8] sm:$0xff]
    %v53 = vld [vmem:[#allocation2 + $0x10] sm:$0xff]
    %v54 = vld [vmem:[#allocation2 + $0x18] sm:$0xff]
    %v55 = vld [vmem:[#allocation2 + $0x20] sm:$0xff]
    %v56 = vld [vmem:[#allocation2 + $0x28] sm:$0xff]
    %v57 = vld [vmem:[#allocation4] sm:$0xff]
    %v58 = vld [vmem:[#allocation4 + $0x8] sm:$0xff]
    %v59 = vld [vmem:[#allocation4 + $0x10] sm:$0xff]
    %v60 = vld [vmem:[#allocation4 + $0x18] sm:$0xff]
    %v61 = vld [vmem:[#allocation4 + $0x20] sm:$0xff]
    %v62 = vld [vmem:[#allocation4 + $0x28] sm:$0xff]
    %v63 = vld [vmem:[#allocation4 + $0x30] sm:$0xff]
    %v64 = vld [vmem:[#allocation4 + $0x38] sm:$0xff]
    %v65 = vld [vmem:[#allocation4 + $0x40] sm:$0xff]
    %v66 = vld [vmem:[#allocation4 + $0x48] sm:$0xff]
    %v67 = vld [vmem:[#allocation4 + $0x50] sm:$0xff]
    %v68 = vld [vmem:[#allocation4 + $0x58] sm:$0xff]
    %v69 = vld [vmem:[#allocation4 + $0x60] sm:$0xff]
    %v70 = vld [vmem:[#allocation4 + $0x68] sm:$0xff]
    %v71 = vld [vmem:[#allocation4 + $0x70] sm:$0xff]
    %v72 = vld [vmem:[#allocation4 + $0x78] sm:$0xff]
    %v73 = vld [vmem:[#allocation4 + $0x80] sm:$0xff]
    %v74 = vld [vmem:[#allocation4 + $0x88] sm:$0xff]
    %v75 = vld [vmem:[#allocation4 + $0x90] sm:$0xff]
    %v76 = vld [vmem:[#allocation4 + $0x98] sm:$0xff]
    %v77 = vld [vmem:[#allocation4 + $0xa0] sm:$0xff]
    %v78 = vld [vmem:[#allocation4 + $0xa8] sm:$0xff]
    %v79 = vld [vmem:[#allocation4 + $0xb0] sm:$0xff]
    %v80 = vld [vmem:[#allocation4 + $0xb8] sm:$0xff]
    %v81 = vld [vmem:[#allocation4 + $0xc0] sm:$0xff]
    %v82 = vld [vmem:[#allocation4 + $0xc8] sm:$0xff]
    %v83 = vld [vmem:[#allocation4 + $0xd0] sm:$0xff]
    %v84 = vld [vmem:[#allocation4 + $0xd8] sm:$0xff]
    %v85 = vld [vmem:[#allocation4 + $0xe0] sm:$0xff]
    %v86 = vld [vmem:[#allocation4 + $0xe8] sm:$0xff]
    %v87 = vld [vmem:[#allocation4 + $0xf0] sm:$0xff]
    %v88 = vld [vmem:[#allocation4 + $0xf8] sm:$0xff]
    %v89 = vld [vmem:[#allocation4 + $0x100] sm:$0xff]
    %v90 = vld [vmem:[#allocation4 + $0x108] sm:$0xff]
    %v91 = vld [vmem:[#allocation4 + $0x110] sm:$0xff]
    %v92 = vld [vmem:[#allocation4 + $0x118] sm:$0xff]
    %v93 = vld [vmem:[#allocation4 + $0x120] sm:$0xff]
    %v94 = vld [vmem:[#allocation4 + $0x128] sm:$0xff]
    %v95 = vld [vmem:[#allocation4 + $0x130] sm:$0xff]
    %v96 = vld [vmem:[#allocation4 + $0x138] sm:$0xff]
    %v97 = vld [vmem:[#allocation4 + $0x140] sm:$0xff]
    %v98 = vld [vmem:[#allocation4 + $0x148] sm:$0xff]
    %v99 = vld [vmem:[#allocation4 + $0x150] sm:$0xff]
    %v100 = vld [vmem:[#allocation4 + $0x158] sm:$0xff]
    %v101 = vld [vmem:[#allocation4 + $0x160] sm:$0xff]
    %v102 = vld [vmem:[#allocation4 + $0x168] sm:$0xff]
    %v103 = vld [vmem:[#allocation4 + $0x170] sm:$0xff]
    %v104 = vld [vmem:[#allocation4 + $0x178] sm:$0xff]
    %v105 = vlaneseq
    %v106 = vshrl.u32 %v105, 7
    %v107 = vsub.s32 0, %v106
    %v108 = vrot.slane %v50, %v107
    %110 = vbcast.lane.b32.xlu0 %v108, 256
    %v111 = vpop.permute.xlu0 %110
    %v112 = vlaneseq
    %v113 = vshrl.u32 %v112, 7
    %v114 = vsub.s32 1, %v113
    %v115 = vrot.slane %v50, %v114
    %117 = vbcast.lane.b32.xlu0 %v115, 256
    %v118 = vpop.permute.xlu0 %117
    %v119 = vlaneseq
    %v120 = vshrl.u32 %v119, 7
    %v121 = vsub.s32 2, %v120
    %v122 = vrot.slane %v50, %v121
    %124 = vbcast.lane.b32.xlu0 %v122, 256
    %v125 = vpop.permute.xlu0 %124
    %v126 = vlaneseq
    %v127 = vshrl.u32 %v126, 7
    %v128 = vsub.s32 3, %v127
    %v129 = vrot.slane %v50, %v128
    %131 = vbcast.lane.b32.xlu0 %v129, 256
    %v132 = vpop.permute.xlu0 %131
    %v133 = vlaneseq
    %v134 = vshrl.u32 %v133, 7
    %v135 = vsub.s32 4, %v134
    %v136 = vrot.slane %v50, %v135
    %138 = vbcast.lane.b32.xlu0 %v136, 256
    %v139 = vpop.permute.xlu0 %138
    %v140 = vlaneseq
    %v141 = vshrl.u32 %v140, 7
    %v142 = vsub.s32 5, %v141
    %v143 = vrot.slane %v50, %v142
    %145 = vbcast.lane.b32.xlu0 %v143, 256
    %v146 = vpop.permute.xlu0 %145
    %v147 = vlaneseq
    %v148 = vshrl.u32 %v147, 7
    %v149 = vsub.s32 6, %v148
    %v150 = vrot.slane %v50, %v149
    %152 = vbcast.lane.b32.xlu0 %v150, 256
    %v153 = vpop.permute.xlu0 %152
    %v154 = vlaneseq
    %v155 = vshrl.u32 %v154, 7
    %v156 = vsub.s32 7, %v155
    %v157 = vrot.slane %v50, %v156
    %159 = vbcast.lane.b32.xlu0 %v157, 256
    %v160 = vpop.permute.xlu0 %159
    %v161 = vmul.f32 %v57, %v111
    %v162 = vmul.f32 %v58, %v111
    %v163 = vmul.f32 %v59, %v111
    %v164 = vmul.f32 %v60, %v111
    %v165 = vmul.f32 %v61, %v111
    %v166 = vmul.f32 %v62, %v111
    %v167 = vmul.f32 %v63, %v118
    %v168 = vmul.f32 %v64, %v118
    %v169 = vmul.f32 %v65, %v118
    %v170 = vmul.f32 %v66, %v118
    %v171 = vmul.f32 %v67, %v118
    %v172 = vmul.f32 %v68, %v118
    %v173 = vmul.f32 %v69, %v125
    %v174 = vmul.f32 %v70, %v125
    %v175 = vmul.f32 %v71, %v125
    %v176 = vmul.f32 %v72, %v125
    %v177 = vmul.f32 %v73, %v125
    %v178 = vmul.f32 %v74, %v125
    %v179 = vmul.f32 %v75, %v132
    %v180 = vmul.f32 %v76, %v132
    %v181 = vmul.f32 %v77, %v132
    %v182 = vmul.f32 %v78, %v132
    %v183 = vmul.f32 %v79, %v132
    %v184 = vmul.f32 %v80, %v132
    %v185 = vmul.f32 %v81, %v139
    %v186 = vmul.f32 %v82, %v139
    %v187 = vmul.f32 %v83, %v139
    %v188 = vmul.f32 %v84, %v139
    %v189 = vmul.f32 %v85, %v139
    %v190 = vmul.f32 %v86, %v139
    %v191 = vmul.f32 %v87, %v146
    %v192 = vmul.f32 %v88, %v146
    %v193 = vmul.f32 %v89, %v146
    %v194 = vmul.f32 %v90, %v146
    %v195 = vmul.f32 %v91, %v146
    %v196 = vmul.f32 %v92, %v146
    %v197 = vmul.f32 %v93, %v153
    %v198 = vmul.f32 %v94, %v153
    %v199 = vmul.f32 %v95, %v153
    %v200 = vmul.f32 %v96, %v153
    %v201 = vmul.f32 %v97, %v153
    %v202 = vmul.f32 %v98, %v153
    %v203 = vmul.f32 %v99, %v160
    %v204 = vmul.f32 %v100, %v160
    %v205 = vmul.f32 %v101, %v160
    %v206 = vmul.f32 %v102, %v160
    %v207 = vmul.f32 %v103, %v160
    %v208 = vmul.f32 %v104, %v160
    %v209 = vrot.slane %v161, 4
    %v210 = vadd.f32 %v161, %v209
    %v211 = vrot.slane %v210, 2
    %v212 = vadd.f32 %v210, %v211
    %v213 = vrot.slane %v212, 1
    %v214 = vadd.f32 %v212, %v213
    %v215 = vrot.slane %v162, 4
    %v216 = vadd.f32 %v162, %v215
    %v217 = vrot.slane %v216, 2
    %v218 = vadd.f32 %v216, %v217
    %v219 = vrot.slane %v218, 1
    %v220 = vadd.f32 %v218, %v219
    %v221 = vrot.slane %v163, 4
    %v222 = vadd.f32 %v163, %v221
    %v223 = vrot.slane %v222, 2
    %v224 = vadd.f32 %v222, %v223
    %v225 = vrot.slane %v224, 1
    %v226 = vadd.f32 %v224, %v225
    %v227 = vrot.slane %v164, 4
    %v228 = vadd.f32 %v164, %v227
    %v229 = vrot.slane %v228, 2
    %v230 = vadd.f32 %v228, %v229
    %v231 = vrot.slane %v230, 1
    %v232 = vadd.f32 %v230, %v231
    %v233 = vrot.slane %v165, 4
    %v234 = vadd.f32 %v165, %v233
    %v235 = vrot.slane %v234, 2
    %v236 = vadd.f32 %v234, %v235
    %v237 = vrot.slane %v236, 1
    %v238 = vadd.f32 %v236, %v237
    %v239 = vrot.slane %v166, 4
    %v240 = vadd.f32 %v166, %v239
    %v241 = vrot.slane %v240, 2
    %v242 = vadd.f32 %v240, %v241
    %v243 = vrot.slane %v242, 1
    %v244 = vadd.f32 %v242, %v243
    %v245 = vrot.slane %v167, 4
    %v246 = vadd.f32 %v167, %v245
    %v247 = vrot.slane %v246, 2
    %v248 = vadd.f32 %v246, %v247
    %v249 = vrot.slane %v248, 1
    %v250 = vadd.f32 %v248, %v249
    %v251 = vrot.slane %v168, 4
    %v252 = vadd.f32 %v168, %v251
    %v253 = vrot.slane %v252, 2
    %v254 = vadd.f32 %v252, %v253
    %v255 = vrot.slane %v254, 1
    %v256 = vadd.f32 %v254, %v255
    %v257 = vrot.slane %v169, 4
    %v258 = vadd.f32 %v169, %v257
    %v259 = vrot.slane %v258, 2
    %v260 = vadd.f32 %v258, %v259
    %v261 = vrot.slane %v260, 1
    %v262 = vadd.f32 %v260, %v261
    %v263 = vrot.slane %v170, 4
    %v264 = vadd.f32 %v170, %v263
    %v265 = vrot.slane %v264, 2
    %v266 = vadd.f32 %v264, %v265
    %v267 = vrot.slane %v266, 1
    %v268 = vadd.f32 %v266, %v267
    %v269 = vrot.slane %v171, 4
    %v270 = vadd.f32 %v171, %v269
    %v271 = vrot.slane %v270, 2
    %v272 = vadd.f32 %v270, %v271
    %v273 = vrot.slane %v272, 1
    %v274 = vadd.f32 %v272, %v273
    %v275 = vrot.slane %v172, 4
    %v276 = vadd.f32 %v172, %v275
    %v277 = vrot.slane %v276, 2
    %v278 = vadd.f32 %v276, %v277
    %v279 = vrot.slane %v278, 1
    %v280 = vadd.f32 %v278, %v279
    %v281 = vrot.slane %v173, 4
    %v282 = vadd.f32 %v173, %v281
    %v283 = vrot.slane %v282, 2
    %v284 = vadd.f32 %v282, %v283
    %v285 = vrot.slane %v284, 1
    %v286 = vadd.f32 %v284, %v285
    %v287 = vrot.slane %v174, 4
    %v288 = vadd.f32 %v174, %v287
    %v289 = vrot.slane %v288, 2
    %v290 = vadd.f32 %v288, %v289
    %v291 = vrot.slane %v290, 1
    %v292 = vadd.f32 %v290, %v291
    %v293 = vrot.slane %v175, 4
    %v294 = vadd.f32 %v175, %v293
    %v295 = vrot.slane %v294, 2
    %v296 = vadd.f32 %v294, %v295
    %v297 = vrot.slane %v296, 1
    %v298 = vadd.f32 %v296, %v297
    %v299 = vrot.slane %v176, 4
    %v300 = vadd.f32 %v176, %v299
    %v301 = vrot.slane %v300, 2
    %v302 = vadd.f32 %v300, %v301
    %v303 = vrot.slane %v302, 1
    %v304 = vadd.f32 %v302, %v303
    %v305 = vrot.slane %v177, 4
    %v306 = vadd.f32 %v177, %v305
    %v307 = vrot.slane %v306, 2
    %v308 = vadd.f32 %v306, %v307
    %v309 = vrot.slane %v308, 1
    %v310 = vadd.f32 %v308, %v309
    %v311 = vrot.slane %v178, 4
    %v312 = vadd.f32 %v178, %v311
    %v313 = vrot.slane %v312, 2
    %v314 = vadd.f32 %v312, %v313
    %v315 = vrot.slane %v314, 1
    %v316 = vadd.f32 %v314, %v315
    %v317 = vrot.slane %v179, 4
    %v318 = vadd.f32 %v179, %v317
    %v319 = vrot.slane %v318, 2
    %v320 = vadd.f32 %v318, %v319
    %v321 = vrot.slane %v320, 1
    %v322 = vadd.f32 %v320, %v321
    %v323 = vrot.slane %v180, 4
    %v324 = vadd.f32 %v180, %v323
    %v325 = vrot.slane %v324, 2
    %v326 = vadd.f32 %v324, %v325
    %v327 = vrot.slane %v326, 1
    %v328 = vadd.f32 %v326, %v327
    %v329 = vrot.slane %v181, 4
    %v330 = vadd.f32 %v181, %v329
    %v331 = vrot.slane %v330, 2
    %v332 = vadd.f32 %v330, %v331
    %v333 = vrot.slane %v332, 1
    %v334 = vadd.f32 %v332, %v333
    %v335 = vrot.slane %v182, 4
    %v336 = vadd.f32 %v182, %v335
    %v337 = vrot.slane %v336, 2
    %v338 = vadd.f32 %v336, %v337
    %v339 = vrot.slane %v338, 1
    %v340 = vadd.f32 %v338, %v339
    %v341 = vrot.slane %v183, 4
    %v342 = vadd.f32 %v183, %v341
    %v343 = vrot.slane %v342, 2
    %v344 = vadd.f32 %v342, %v343
    %v345 = vrot.slane %v344, 1
    %v346 = vadd.f32 %v344, %v345
    %v347 = vrot.slane %v184, 4
    %v348 = vadd.f32 %v184, %v347
    %v349 = vrot.slane %v348, 2
    %v350 = vadd.f32 %v348, %v349
    %v351 = vrot.slane %v350, 1
    %v352 = vadd.f32 %v350, %v351
    %v353 = vrot.slane %v185, 4
    %v354 = vadd.f32 %v185, %v353
    %v355 = vrot.slane %v354, 2
    %v356 = vadd.f32 %v354, %v355
    %v357 = vrot.slane %v356, 1
    %v358 = vadd.f32 %v356, %v357
    %v359 = vrot.slane %v186, 4
    %v360 = vadd.f32 %v186, %v359
    %v361 = vrot.slane %v360, 2
    %v362 = vadd.f32 %v360, %v361
    %v363 = vrot.slane %v362, 1
    %v364 = vadd.f32 %v362, %v363
    %v365 = vrot.slane %v187, 4
    %v366 = vadd.f32 %v187, %v365
    %v367 = vrot.slane %v366, 2
    %v368 = vadd.f32 %v366, %v367
    %v369 = vrot.slane %v368, 1
    %v370 = vadd.f32 %v368, %v369
    %v371 = vrot.slane %v188, 4
    %v372 = vadd.f32 %v188, %v371
    %v373 = vrot.slane %v372, 2
    %v374 = vadd.f32 %v372, %v373
    %v375 = vrot.slane %v374, 1
    %v376 = vadd.f32 %v374, %v375
    %v377 = vrot.slane %v189, 4
    %v378 = vadd.f32 %v189, %v377
    %v379 = vrot.slane %v378, 2
    %v380 = vadd.f32 %v378, %v379
    %v381 = vrot.slane %v380, 1
    %v382 = vadd.f32 %v380, %v381
    %v383 = vrot.slane %v190, 4
    %v384 = vadd.f32 %v190, %v383
    %v385 = vrot.slane %v384, 2
    %v386 = vadd.f32 %v384, %v385
    %v387 = vrot.slane %v386, 1
    %v388 = vadd.f32 %v386, %v387
    %v389 = vrot.slane %v191, 4
    %v390 = vadd.f32 %v191, %v389
    %v391 = vrot.slane %v390, 2
    %v392 = vadd.f32 %v390, %v391
    %v393 = vrot.slane %v392, 1
    %v394 = vadd.f32 %v392, %v393
    %v395 = vrot.slane %v192, 4
    %v396 = vadd.f32 %v192, %v395
    %v397 = vrot.slane %v396, 2
    %v398 = vadd.f32 %v396, %v397
    %v399 = vrot.slane %v398, 1
    %v400 = vadd.f32 %v398, %v399
    %v401 = vrot.slane %v193, 4
    %v402 = vadd.f32 %v193, %v401
    %v403 = vrot.slane %v402, 2
    %v404 = vadd.f32 %v402, %v403
    %v405 = vrot.slane %v404, 1
    %v406 = vadd.f32 %v404, %v405
    %v407 = vrot.slane %v194, 4
    %v408 = vadd.f32 %v194, %v407
    %v409 = vrot.slane %v408, 2
    %v410 = vadd.f32 %v408, %v409
    %v411 = vrot.slane %v410, 1
    %v412 = vadd.f32 %v410, %v411
    %v413 = vrot.slane %v195, 4
    %v414 = vadd.f32 %v195, %v413
    %v415 = vrot.slane %v414, 2
    %v416 = vadd.f32 %v414, %v415
    %v417 = vrot.slane %v416, 1
    %v418 = vadd.f32 %v416, %v417
    %v419 = vrot.slane %v196, 4
    %v420 = vadd.f32 %v196, %v419
    %v421 = vrot.slane %v420, 2
    %v422 = vadd.f32 %v420, %v421
    %v423 = vrot.slane %v422, 1
    %v424 = vadd.f32 %v422, %v423
    %v425 = vrot.slane %v197, 4
    %v426 = vadd.f32 %v197, %v425
    %v427 = vrot.slane %v426, 2
    %v428 = vadd.f32 %v426, %v427
    %v429 = vrot.slane %v428, 1
    %v430 = vadd.f32 %v428, %v429
    %v431 = vrot.slane %v198, 4
    %v432 = vadd.f32 %v198, %v431
    %v433 = vrot.slane %v432, 2
    %v434 = vadd.f32 %v432, %v433
    %v435 = vrot.slane %v434, 1
    %v436 = vadd.f32 %v434, %v435
    %v437 = vrot.slane %v199, 4
    %v438 = vadd.f32 %v199, %v437
    %v439 = vrot.slane %v438, 2
    %v440 = vadd.f32 %v438, %v439
    %v441 = vrot.slane %v440, 1
    %v442 = vadd.f32 %v440, %v441
    %v443 = vrot.slane %v200, 4
    %v444 = vadd.f32 %v200, %v443
    %v445 = vrot.slane %v444, 2
    %v446 = vadd.f32 %v444, %v445
    %v447 = vrot.slane %v446, 1
    %v448 = vadd.f32 %v446, %v447
    %v449 = vrot.slane %v201, 4
    %v450 = vadd.f32 %v201, %v449
    %v451 = vrot.slane %v450, 2
    %v452 = vadd.f32 %v450, %v451
    %v453 = vrot.slane %v452, 1
    %v454 = vadd.f32 %v452, %v453
    %v455 = vrot.slane %v202, 4
    %v456 = vadd.f32 %v202, %v455
    %v457 = vrot.slane %v456, 2
    %v458 = vadd.f32 %v456, %v457
    %v459 = vrot.slane %v458, 1
    %v460 = vadd.f32 %v458, %v459
    %v461 = vrot.slane %v203, 4
    %v462 = vadd.f32 %v203, %v461
    %v463 = vrot.slane %v462, 2
    %v464 = vadd.f32 %v462, %v463
    %v465 = vrot.slane %v464, 1
    %v466 = vadd.f32 %v464, %v465
    %v467 = vrot.slane %v204, 4
    %v468 = vadd.f32 %v204, %v467
    %v469 = vrot.slane %v468, 2
    %v470 = vadd.f32 %v468, %v469
    %v471 = vrot.slane %v470, 1
    %v472 = vadd.f32 %v470, %v471
    %v473 = vrot.slane %v205, 4
    %v474 = vadd.f32 %v205, %v473
    %v475 = vrot.slane %v474, 2
    %v476 = vadd.f32 %v474, %v475
    %v477 = vrot.slane %v476, 1
    %v478 = vadd.f32 %v476, %v477
    %v479 = vrot.slane %v206, 4
    %v480 = vadd.f32 %v206, %v479
    %v481 = vrot.slane %v480, 2
    %v482 = vadd.f32 %v480, %v481
    %v483 = vrot.slane %v482, 1
    %v484 = vadd.f32 %v482, %v483
    %v485 = vrot.slane %v207, 4
    %v486 = vadd.f32 %v207, %v485
    %v487 = vrot.slane %v486, 2
    %v488 = vadd.f32 %v486, %v487
    %v489 = vrot.slane %v488, 1
    %v490 = vadd.f32 %v488, %v489
    %v491 = vrot.slane %v208, 4
    %v492 = vadd.f32 %v208, %v491
    %v493 = vrot.slane %v492, 2
    %v494 = vadd.f32 %v492, %v493
    %v495 = vrot.slane %v494, 1
    %v496 = vadd.f32 %v494, %v495
    %vm545 = vcmask 1041409
    %v546 = vsel %vm545, %v250, %v214
    %vm547 = vcmask 1042434
    %v548 = vsel %vm547, %v286, %v546
    %vm549 = vcmask 1043459
    %v550 = vsel %vm549, %v322, %v548
    %vm551 = vcmask 1044484
    %v552 = vsel %vm551, %v358, %v550
    %vm553 = vcmask 1045509
    %v554 = vsel %vm553, %v394, %v552
    %vm555 = vcmask 1046534
    %v556 = vsel %vm555, %v430, %v554
    %vm557 = vcmask 1047559
    %v558 = vsel %vm557, %v466, %v556
    %v559 = vsel %vm545, %v256, %v220
    %v560 = vsel %vm547, %v292, %v559
    %v561 = vsel %vm549, %v328, %v560
    %v562 = vsel %vm551, %v364, %v561
    %v563 = vsel %vm553, %v400, %v562
    %v564 = vsel %vm555, %v436, %v563
    %v565 = vsel %vm557, %v472, %v564
    %v566 = vsel %vm545, %v262, %v226
    %v567 = vsel %vm547, %v298, %v566
    %v568 = vsel %vm549, %v334, %v567
    %v569 = vsel %vm551, %v370, %v568
    %v570 = vsel %vm553, %v406, %v569
    %v571 = vsel %vm555, %v442, %v570
    %v572 = vsel %vm557, %v478, %v571
    %v573 = vsel %vm545, %v268, %v232
    %v574 = vsel %vm547, %v304, %v573
    %v575 = vsel %vm549, %v340, %v574
    %v576 = vsel %vm551, %v376, %v575
    %v577 = vsel %vm553, %v412, %v576
    %v578 = vsel %vm555, %v448, %v577
    %v579 = vsel %vm557, %v484, %v578
    %v580 = vsel %vm545, %v274, %v238
    %v581 = vsel %vm547, %v310, %v580
    %v582 = vsel %vm549, %v346, %v581
    %v583 = vsel %vm551, %v382, %v582
    %v584 = vsel %vm553, %v418, %v583
    %v585 = vsel %vm555, %v454, %v584
    %v586 = vsel %vm557, %v490, %v585
    %v587 = vsel %vm545, %v280, %v244
    %v588 = vsel %vm547, %v316, %v587
    %v589 = vsel %vm549, %v352, %v588
    %v590 = vsel %vm551, %v388, %v589
    %v591 = vsel %vm553, %v424, %v590
    %v592 = vsel %vm555, %v460, %v591
    %v593 = vsel %vm557, %v496, %v592
    %v600 = vadd.f32 %v51, %v558
    %v601 = vadd.f32 %v52, %v565
    %v602 = vadd.f32 %v53, %v572
    %v603 = vadd.f32 %v54, %v579
    %v604 = vadd.f32 %v55, %v586
    %v605 = vadd.f32 %v56, %v593
    %606 = vst [vmem:[#allocation2] sm:$0xff] %v600
    %607 = vst [vmem:[#allocation2 + $0x8] sm:$0xff] %v601
    %608 = vst [vmem:[#allocation2 + $0x10] sm:$0xff] %v602
    %609 = vst [vmem:[#allocation2 + $0x18] sm:$0xff] %v603
    %610 = vst [vmem:[#allocation2 + $0x20] sm:$0xff] %v604
    %611 = vst [vmem:[#allocation2 + $0x28] sm:$0xff] %v605
    %v612 = vld [vmem:[#allocation3] sm:$0xff]
    %vm613 = vcmask 64512
    %v614 = vsel %vm613, %v50, 0.0
    %615 = vadd.xlane.f32.xlu0 %v614
    %v616 = vpop.xlane.xlu0 %615
    %v617 = vadd.f32 %v612, %v616
    %vm618 = vcmask 7168
    %619 = vst.msk [vmem:[#allocation3] sm:$0xff] %vm618, %v617
    // Predicated region
    $region22: #{tpu_custom_call.1} parent=1 // pred_check
      %p620 = pneg %p38
    $region23: #{tpu_custom_call.1} parent=1 // pred_check_branch
      %622 = sbr.rel (%p620) target = $region25
    $region24: #{tpu_custom_call.1} parent=1 // pred_region
      %v623 = vld [vmem:[#allocation3] sm:$0xff]
      %v624 = vmax.f32 %v623, 1.0
      %v625 = vld [vmem:[#allocation2] sm:$0xff]
      %v626 = vld [vmem:[#allocation2 + $0x8] sm:$0xff]
      %v627 = vld [vmem:[#allocation2 + $0x10] sm:$0xff]
      %v628 = vld [vmem:[#allocation2 + $0x18] sm:$0xff]
      %v629 = vld [vmem:[#allocation2 + $0x20] sm:$0xff]
      %v630 = vld [vmem:[#allocation2 + $0x28] sm:$0xff]
      %v631 = vrcp.pop %v624
      %633 = vset.pattern.permute.xlu0 0
      %634 = vperm.xlu0 %633, %v631
      %v635 = vpop.permute.xlu0 %634
      %v637 = vmul.f32 %v625, %v635
      %v638 = vmul.f32 %v626, %v635
      %v639 = vmul.f32 %v627, %v635
      %v640 = vmul.f32 %v628, %v635
      %v641 = vmul.f32 %v629, %v635
      %v642 = vmul.f32 %v630, %v635
      %643 = vst [vmem:[#allocation9] sm:$0xff] %v637
      %644 = vst [vmem:[#allocation9 + $0x8] sm:$0xff] %v638
      %645 = vst [vmem:[#allocation9 + $0x10] sm:$0xff] %v639
      %646 = vst [vmem:[#allocation9 + $0x18] sm:$0xff] %v640
      %647 = vst [vmem:[#allocation9 + $0x20] sm:$0xff] %v641
      %648 = vst [vmem:[#allocation9 + $0x28] sm:$0xff] %v642
    $region25: #{tpu_custom_call.1} parent=1 // pred_fallthru
      _
    // Predicated region
    $region26: #{tpu_custom_call.1} parent=1 // pred_check
      _
    $region27: #{tpu_custom_call.1} parent=1 // pred_check_branch
      %650 = sbr.rel (0) target = $region29
    $region28: #{tpu_custom_call.1} parent=1 // pred_region
      %s652 = ssub.s32 768, 768
      %653 = vsyncadd [#allocation6], %s652
      %s655 = sshll.u32 [#allocation9], 4
      %s656 = int_to_ptr.vmem [resolvable:$true] %s655
      %658 = dma.vmem_to_hbm [thread:$0]  %s656, 768, %s2, [#allocation6]
    $region29: #{tpu_custom_call.1} parent=1 // pred_fallthru
      _
    // Predicated region
    $region30: #{tpu_custom_call.1} parent=1 // pred_check
      _
    $region31: #{tpu_custom_call.1} parent=1 // pred_check_branch
      %660 = sbr.rel (0) target = $region33
    $region32: #{tpu_custom_call.1} parent=1 // pred_region
      %661 = dma.done [#allocation6], 768
    $region33: #{tpu_custom_call.1} parent=1 // pred_fallthru
      _
    %662 = vsyncpa [#allocation5], 1
    %663 = vsyncpa [#allocation8], 1
    %664 = vsyncpa [#allocation6], 1

</llo_original>
